<compile_context>
chip_gen: v6e
topology: v6e:2x2x1
jax: 0.10.0
libtpu: 0.0.40
codegen_flags: <defaults>
</compile_context>

<pallas_src>
import functools

import jax
import jax.numpy as jnp
from jax.experimental import pallas as pl
from jax.experimental.pallas import tpu as pltpu

LANE = 128
SUBLANE = 8
MAX_BATCH_TILE = 4096  # diminishing returns past this; keeps per-step DMA sane


def _round_up(x, m):
    return ((x + m - 1) // m) * m


def _round_down(x, m):
    return (x // m) * m


def _mlp_kernel(x_ref, w_ref, b_ref, out_ref, *, layer_dims):
    """Whole MLP for one batch tile.

    x_ref:   (TB, K0)       f32   raw input rows (K0 = round_up(in_features, 8))
    w_ref:   (L, P, P)      bf16  stacked zero-padded weights, (in, out) layout
    b_ref:   (L, 1, P)      f32   stacked zero-padded biases
    out_ref: (TB, OP)       bf16  lane-dense output (OP = round_up(out, 128))
    layer_dims: static tuple of per-layer padded (K_i, N_i).
    """
    num_layers = len(layer_dims)
    h = x_ref[...].astype(jnp.bfloat16)  # single cast; feeds the MXU
    for i, (k, n) in enumerate(layer_dims):
        w = w_ref[i, :k, :n]  # static, tile-aligned sub-view of the stack
        acc = jnp.dot(h, w, preferred_element_type=jnp.float32)
        acc = acc + b_ref[i, :, :n]  # f32 bias add on the VPU
        if i < num_layers - 1:
            # sigmoid(x) = 1/(1+exp(-x)); exp and the approximate reciprocal
            # both lower to the EUP slot, keeping the VALU free.
            acc = pl.reciprocal(1.0 + jnp.exp(-acc), approx=True)
            h = acc.astype(jnp.bfloat16)  # back to bf16 for the next MXU pass
        else:
            out_ref[...] = acc.astype(out_ref.dtype)


def pack_params(params):
    """Pack per-layer (W(in,out), b(out,)) into one bf16 weight stack and one
    f32 bias stack. Call ONCE (hoisted out of the per-forward path).

    Padded rows/cols MUST remain exactly zero (see invariant at top of file).
    """
    # TODO(synk): ragged per-layer weight packing (and optional fp8 weights on
    # v7x) to shrink the resident stack when layer widths are heavily skewed.
    num_layers = len(params)
    in_features = params[0][0].shape[0]
    widths = [w.shape[1] for w, _ in params]
    p = _round_up(max([in_features] + widths), LANE)

    w_stack = jnp.zeros((num_layers, p, p), jnp.bfloat16)
    b_stack = jnp.zeros((num_layers, 1, p), jnp.float32)
    for i, (w, b) in enumerate(params):
        fi, fo = w.shape
        w_stack = w_stack.at[i, :fi, :fo].set(w.astype(jnp.bfloat16))
        b_stack = b_stack.at[i, 0, :fo].set(b.astype(jnp.float32))

    k0 = _round_up(in_features, SUBLANE)
    padded_widths = [_round_up(d, LANE) for d in widths]
    layer_dims = tuple(zip([k0] + padded_widths[:-1], padded_widths))
    meta = dict(
        in_features=in_features,
        out_features=widths[-1],
        k0=k0,
        out_pad=padded_widths[-1],
        padded_dim=p,
        layer_dims=layer_dims,
    )
    return w_stack, b_stack, meta


def _const_spec(block_shape):
    """Constant-index (VMEM-resident) spec; single-buffered when supported."""
    idx = lambda i, _n=len(block_shape): (0,) * _n
    try:
        return pl.BlockSpec(block_shape, idx, pipeline_mode=pl.Buffered(1))
    except (TypeError, AttributeError):
        return pl.BlockSpec(block_shape, idx)


def simple_classifier_forward(x, w_stack, b_stack, meta, *, vmem_budget_bytes=None):
    """x: (batch, in_features) f32; (w_stack, b_stack, meta) from pack_params."""
    batch, in_features = x.shape
    assert in_features == meta["in_features"], (in_features, meta["in_features"])
    k0 = meta["k0"]
    out_pad = meta["out_pad"]
    out_features = meta["out_features"]
    layer_dims = meta["layer_dims"]
    num_layers = len(layer_dims)
    p = meta["padded_dim"]

    # ---- VMEM budget & batch tile ------------------------------------------
    if vmem_budget_bytes is None:
        try:
            vmem_cap = pltpu.get_tpu_info().vmem_capacity_bytes
        except Exception:
            vmem_cap = 64 * 1024 * 1024  # conservative (v7x per-core size)
        # ~75% of physical: ~48 MiB on v7x (64 MiB/core), ~96 MiB on v5e/v6e.
        vmem_budget_bytes = min(int(vmem_cap) * 3 // 4, 96 * 1024 * 1024)

    resident = w_stack.size * 2 + b_stack.size * 4          # single-buffered
    per_row = 2 * (k0 * 4) + 2 * (out_pad * 2)              # dbl-buffered x(f32)+out(bf16)
    tb_max = max(_round_down((vmem_budget_bytes - resident) // per_row, SUBLANE),
                 SUBLANE)

    padded_batch = _round_up(max(batch, SUBLANE), SUBLANE)
    tb = min(tb_max, MAX_BATCH_TILE, padded_batch)
    # v7x megacore: a large batch should yield >=2 grid steps so the second
    # TensorCore gets work (no-op for small batches).
    if padded_batch <= tb and padded_batch >= 32 * SUBLANE:
        tb = _round_up((padded_batch + 1) // 2, SUBLANE)
    padded_batch = _round_up(padded_batch, tb)
    grid = (padded_batch // tb,)

    # ---- input: pad only if needed (no padded copy in the aligned case) -----
    if (padded_batch, k0) != (batch, in_features):
        x_in = jnp.pad(x, ((0, padded_batch - batch), (0, k0 - in_features)))
    else:
        x_in = x

    # ---- cost estimate & scoped VMEM limit -----------------------------------
    flops = 2 * padded_batch * sum(k * n for k, n in layer_dims)
    transcendentals = 2 * padded_batch * sum(n for _, n in layer_dims[:-1])
    bytes_accessed = (x_in.size * 4 + w_stack.size * 2 + b_stack.size * 4
                      + padded_batch * out_pad * 2)
    vmem_needed = resident + tb * per_row
    vmem_limit = min(vmem_budget_bytes,
                     max(_round_up(vmem_needed, 1 << 20) + (4 << 20), 16 << 20))

    kernel = functools.partial(_mlp_kernel, layer_dims=layer_dims)
    out_padded = pl.pallas_call(
        kernel,
        out_shape=jax.ShapeDtypeStruct((padded_batch, out_pad), jnp.bfloat16),
        grid=grid,
        in_specs=[
            # batch-tiled activations (double-buffered stream)
            pl.BlockSpec((tb, k0), lambda i: (i, 0)),
            # weights / biases: constant index_map -> VMEM-resident, 1 buffer
            _const_spec((num_layers, p, p)),
            _const_spec((num_layers, 1, p)),
        ],
        out_specs=pl.BlockSpec((tb, out_pad), lambda i: (i, 0)),
        compiler_params=pltpu.CompilerParams(
            dimension_semantics=("parallel",),
            vmem_limit_bytes=int(vmem_limit),
        ),
        cost_estimate=pl.CostEstimate(
            flops=int(flops),
            transcendentals=int(transcendentals),
            bytes_accessed=int(bytes_accessed),
        ),
    )(x_in, w_stack, b_stack)

    # Slice away batch/lane padding; return f32 to match the nn.Module output.
    return out_padded[:batch, :out_features].astype(jnp.float32)


def init_params(key, in_channels, hidden_channels, output_size):
    """Deterministic init mimicking nn.Linear's U(-1/sqrt(fan_in), 1/sqrt(fan_in))."""
    params = []
    dims = [in_channels] + list(hidden_channels) + [output_size]
    for i in range(len(dims) - 1):
        fan_in, fan_out = dims[i], dims[i + 1]
        key, kw, kb = jax.random.split(key, 3)
        bound = 1.0 / jnp.sqrt(fan_in)
        # Stored directly as (in, out) == W.T of the PyTorch (out, in) weight.
        w = jax.random.uniform(kw, (fan_in, fan_out), jnp.float32, -bound, bound)
        b = jax.random.uniform(kb, (fan_out,), jnp.float32, -bound, bound)
        params.append((w, b))
    return params


def reference_forward(x, params):
    """Pure-JAX f32 reference for correctness checking."""
    h = x
    for i, (w, b) in enumerate(params):
        h = h @ w + b
        if i < len(params) - 1:
            h = jax.nn.sigmoid(h)
    return h


if __name__ == "__main__":
    # Small shapes consistent with the module:
    #   batch=8, in_channels=32, hidden_channels=[64, 32], output_size=16
    batch = 8
    input_size = 32          # stored by the module; Linear consumes in_channels
    in_channels = 32
    hidden_channels = [64, 32]
    output_size = 16

    key = jax.random.PRNGKey(0)
    key, kx = jax.random.split(key)
    x = jax.random.normal(kx, (batch, in_channels), jnp.float32)

    params = init_params(key, in_channels, hidden_channels, output_size)

    # Pack parameters ONCE (hoisted out of the per-forward path).
    w_stack, b_stack, meta = pack_params(params)

    out = simple_classifier_forward(x, w_stack, b_stack, meta)
    out = jax.block_until_ready(out)

    ref = reference_forward(x, params)
    assert out.shape == (batch, output_size), out.shape
    # Tolerance relaxed vs the f32 reference: bf16 MXU inputs, bf16 output
    # store, and the approximate EUP reciprocal in the sigmoid.
    err = float(jnp.max(jnp.abs(out - ref)))
    assert jnp.allclose(out, ref, atol=5e-2, rtol=5e-2), \
        f"mismatch vs reference, max |err|={err}"

    print("KERNEL_OK")
</pallas_src>

<mosaic_0001>
module attributes {stable_mosaic.version = 11 : i64} {
  func.func @_mlp_kernel(%arg0: i32, %arg1: memref<8x32xf32, #tpu.memory_space<vmem>>, %arg2: memref<3x128x128xbf16, #tpu.memory_space<vmem>>, %arg3: memref<3x1x128xf32, #tpu.memory_space<vmem>>, %arg4: memref<8x128xbf16, #tpu.memory_space<vmem>>) attributes {dimension_semantics = [#tpu.dimension_semantics<parallel>], iteration_bounds = array<i64: 1>, scalar_prefetch = 0 : i64, scratch_operands = 0 : i64, tpu.core_type = #tpu.core_type<tc>, window_params = [{transform_indices = @transform_0, window_bounds = array<i64: 8, 32>}, {pipeline_mode = #tpu.pipeline_mode<synchronous>, transform_indices = @transform_1, window_bounds = array<i64: 3, 128, 128>}, {pipeline_mode = #tpu.pipeline_mode<synchronous>, transform_indices = @transform_2, window_bounds = array<i64: 3, 1, 128>}, {transform_indices = @transform_3, window_bounds = array<i64: 8, 128>}]} {
    %c0 = arith.constant 0 : index
    %c0_0 = arith.constant 0 : index
    %0 = vector.load %arg1[%c0, %c0_0] : memref<8x32xf32, #tpu.memory_space<vmem>>, vector<8x32xf32>
    %1 = arith.truncf %0 : vector<8x32xf32> to vector<8x32xbf16>
    %c0_1 = arith.constant 0 : index
    %c0_2 = arith.constant 0 : index
    %c0_3 = arith.constant 0 : index
    %2 = vector.load %arg2[%c0_1, %c0_2, %c0_3] : memref<3x128x128xbf16, #tpu.memory_space<vmem>>, vector<1x32x128xbf16>
    %3 = vector.shape_cast %2 : vector<1x32x128xbf16> to vector<32x128xbf16>
    %cst = arith.constant dense<0.000000e+00> : vector<8x128xf32>
    %4 = tpu.matmul %1, %3, %cst {dimension_numbers = #tpu.dot_dimension_numbers<[1], [0], [0], [1], [0, 0, 1, 1], [], []>} : vector<8x32xbf16>, vector<32x128xbf16>, vector<8x128xf32> -> vector<8x128xf32>
    %c0_4 = arith.constant 0 : index
    %c0_5 = arith.constant 0 : index
    %c0_6 = arith.constant 0 : index
    %5 = vector.load %arg3[%c0_4, %c0_5, %c0_6] : memref<3x1x128xf32, #tpu.memory_space<vmem>>, vector<1x1x128xf32>
    %6 = vector.shape_cast %5 : vector<1x1x128xf32> to vector<1x128xf32>
    %7 = vector.broadcast %6 : vector<1x128xf32> to vector<8x128xf32>
    %8 = arith.addf %4, %7 : vector<8x128xf32>
    %cst_7 = arith.constant 0.000000e+00 : f32
    %9 = vector.broadcast %cst_7 : f32 to vector<8x128xf32>
    %10 = arith.subf %9, %8 : vector<8x128xf32>
    %11 = math.exp %10 : vector<8x128xf32>
    %cst_8 = arith.constant 1.000000e+00 : f32
    %12 = vector.broadcast %cst_8 : f32 to vector<8x128xf32>
    %13 = arith.addf %12, %11 : vector<8x128xf32>
    %14 = tpu.reciprocal %13 {approx = true} : vector<8x128xf32> -> vector<8x128xf32>
    %15 = arith.truncf %14 : vector<8x128xf32> to vector<8x128xbf16>
    %c1 = arith.constant 1 : index
    %c0_9 = arith.constant 0 : index
    %c0_10 = arith.constant 0 : index
    %16 = vector.load %arg2[%c1, %c0_9, %c0_10] : memref<3x128x128xbf16, #tpu.memory_space<vmem>>, vector<1x128x128xbf16>
    %17 = vector.shape_cast %16 : vector<1x128x128xbf16> to vector<128x128xbf16>
    %cst_11 = arith.constant dense<0.000000e+00> : vector<8x128xf32>
    %18 = tpu.matmul %15, %17, %cst_11 {dimension_numbers = #tpu.dot_dimension_numbers<[1], [0], [0], [1], [0, 0, 1, 1], [], []>} : vector<8x128xbf16>, vector<128x128xbf16>, vector<8x128xf32> -> vector<8x128xf32>
    %c1_12 = arith.constant 1 : index
    %c0_13 = arith.constant 0 : index
    %c0_14 = arith.constant 0 : index
    %19 = vector.load %arg3[%c1_12, %c0_13, %c0_14] : memref<3x1x128xf32, #tpu.memory_space<vmem>>, vector<1x1x128xf32>
    %20 = vector.shape_cast %19 : vector<1x1x128xf32> to vector<1x128xf32>
    %21 = vector.broadcast %20 : vector<1x128xf32> to vector<8x128xf32>
    %22 = arith.addf %18, %21 : vector<8x128xf32>
    %cst_15 = arith.constant 0.000000e+00 : f32
    %23 = vector.broadcast %cst_15 : f32 to vector<8x128xf32>
    %24 = arith.subf %23, %22 : vector<8x128xf32>
    %25 = math.exp %24 : vector<8x128xf32>
    %cst_16 = arith.constant 1.000000e+00 : f32
    %26 = vector.broadcast %cst_16 : f32 to vector<8x128xf32>
    %27 = arith.addf %26, %25 : vector<8x128xf32>
    %28 = tpu.reciprocal %27 {approx = true} : vector<8x128xf32> -> vector<8x128xf32>
    %29 = arith.truncf %28 : vector<8x128xf32> to vector<8x128xbf16>
    %c2 = arith.constant 2 : index
    %c0_17 = arith.constant 0 : index
    %c0_18 = arith.constant 0 : index
    %30 = vector.load %arg2[%c2, %c0_17, %c0_18] : memref<3x128x128xbf16, #tpu.memory_space<vmem>>, vector<1x128x128xbf16>
    %31 = vector.shape_cast %30 : vector<1x128x128xbf16> to vector<128x128xbf16>
    %cst_19 = arith.constant dense<0.000000e+00> : vector<8x128xf32>
    %32 = tpu.matmul %29, %31, %cst_19 {dimension_numbers = #tpu.dot_dimension_numbers<[1], [0], [0], [1], [0, 0, 1, 1], [], []>} : vector<8x128xbf16>, vector<128x128xbf16>, vector<8x128xf32> -> vector<8x128xf32>
    %c2_20 = arith.constant 2 : index
    %c0_21 = arith.constant 0 : index
    %c0_22 = arith.constant 0 : index
    %33 = vector.load %arg3[%c2_20, %c0_21, %c0_22] : memref<3x1x128xf32, #tpu.memory_space<vmem>>, vector<1x1x128xf32>
    %34 = vector.shape_cast %33 : vector<1x1x128xf32> to vector<1x128xf32>
    %35 = vector.broadcast %34 : vector<1x128xf32> to vector<8x128xf32>
    %36 = arith.addf %32, %35 : vector<8x128xf32>
    %37 = arith.truncf %36 : vector<8x128xf32> to vector<8x128xbf16>
    %c0_23 = arith.constant 0 : index
    %c0_24 = arith.constant 0 : index
    %38 = vector.load %arg4[%c0_23, %c0_24] : memref<8x128xbf16, #tpu.memory_space<vmem>>, vector<8x128xbf16>
    tpu.vector_store %arg4[%c0_23, %c0_24], %37 {strides = array<i32>} : memref<8x128xbf16, #tpu.memory_space<vmem>>, vector<8x128xbf16>,
    return
  }
  func.func @transform_0(%arg0: i32) -> (i32, i32) {
    %c0_i32 = arith.constant 0 : i32
    %c0_i32_0 = arith.constant 0 : i32
    return %arg0, %c0_i32 : i32, i32
  }
  func.func @transform_1(%arg0: i32) -> (i32, i32, i32) {
    %c0_i32 = arith.constant 0 : i32
    %c0_i32_0 = arith.constant 0 : i32
    %c0_i32_1 = arith.constant 0 : i32
    %c0_i32_2 = arith.constant 0 : i32
    return %c0_i32, %c0_i32_0, %c0_i32_1 : i32, i32, i32
  }
  func.func @transform_2(%arg0: i32) -> (i32, i32, i32) {
    %c0_i32 = arith.constant 0 : i32
    %c0_i32_0 = arith.constant 0 : i32
    %c0_i32_1 = arith.constant 0 : i32
    %c0_i32_2 = arith.constant 0 : i32
    return %c0_i32, %c0_i32_0, %c0_i32_1 : i32, i32, i32
  }
  func.func @transform_3(%arg0: i32) -> (i32, i32) {
    %c0_i32 = arith.constant 0 : i32
    %c0_i32_0 = arith.constant 0 : i32
    return %arg0, %c0_i32 : i32, i32
  }
}

</mosaic_0001>

<llo_original>
// kernel: tpu_custom_call.1
$region0: #{tpu_custom_call.1}
  #allocation0 [shape = 'u32[]', space=smem, size = 0x4, offset = 0x4, fixed_abs, tag = 'smem constant byte address 0x4 - core index']
  #allocation1 [shape = 'u32[144,128]{1,0:T(1,128)}', space=vmem, size = 0x12000, scoped, tag = 'internal scratch']
  %s0 = inlined_call_operand.hbm [shape: f32[8,32], index: 0, kind: input, shape index: {}]
  %s1 = inlined_call_operand.hbm [shape: bf16[3,128,128], index: 1, kind: input, shape index: {}]
  %s2 = inlined_call_operand.vmem [shape: f32[3,1,128], index: 2, kind: input, shape index: {}]
  %s3 = inlined_call_operand.hbm [shape: bf16[8,128], index: 3, kind: output, shape index: {}]
  %s4 = sld [smem:[#allocation0]]
  $region30: #{tpu_custom_call.1} parent=0
    _
  %s6 = ssub.s32 1, %s4
  %s7 = scalar_select 0, %s6, %s4
  $region1: #{tpu_custom_call.1} parent=0
    #allocation2 [shape = 'u8[4096]{0}', space=vmem, size = 0x1000, scoped, tag = 'input window, operand 0, single buffered']
    #allocation3 [shape = 's32[1]{0}', space=sflag, size = 0x4, scoped, tag = 'scoped memory for tpu_custom_call.1']
    #allocation4 [shape = 's32[1]{0}', space=sflag, size = 0x4, scoped, tag = 'scoped memory for tpu_custom_call.1']
    #allocation5 [shape = 'u8[98304]{0}', space=vmem, size = 0x18000, scoped, tag = 'input window, operand 1, single buffered']
    #allocation6 [shape = 's32[1]{0}', space=sflag, size = 0x4, scoped, tag = 'scoped memory for tpu_custom_call.1']
    #allocation7 [shape = 'u8[2048]{0}', space=vmem, size = 0x800, scoped, tag = 'output window, operand 0, single buffered']
    %8 = vsyncpa [#allocation3], 0
    %9 = vsyncpa [#allocation6], 0
    %10 = vsyncpa [#allocation4], 0
    // Predicated region
    $region2: #{tpu_custom_call.1} parent=1 // pred_check
      _
    $region3: #{tpu_custom_call.1} parent=1 // pred_check_branch
      %12 = sbr.rel (0) target = $region5
    $region4: #{tpu_custom_call.1} parent=1 // pred_region
      %s14 = ssub.s32 128, 128
      %15 = vsyncadd [#allocation3], %s14
      %s17 = sshll.u32 [#allocation2], 4
      %s18 = int_to_ptr.vmem [resolvable:$true] %s17
      %20 = dma.hbm_to_vmem [thread:$0]  %s0, 128, %s18, [#allocation3]
    $region5: #{tpu_custom_call.1} parent=1 // pred_fallthru
      _
    // Predicated region
    $region6: #{tpu_custom_call.1} parent=1 // pred_check
      _
    $region7: #{tpu_custom_call.1} parent=1 // pred_check_branch
      %22 = sbr.rel (0) target = $region9
    $region8: #{tpu_custom_call.1} parent=1 // pred_region
      %s24 = ssub.s32 3072, 3072
      %25 = vsyncadd [#allocation6], %s24
      %s26 = sshll.u32 [#allocation5], 4
      %s27 = int_to_ptr.vmem [resolvable:$true] %s26
      %32 = dma.hbm_to_vmem [thread:$0]  %s1, 3072, %s27, [#allocation6], 64, 64, 4
    $region9: #{tpu_custom_call.1} parent=1 // pred_fallthru
      _
    // Predicated region
    $region10: #{tpu_custom_call.1} parent=1 // pred_check
      _
    $region11: #{tpu_custom_call.1} parent=1 // pred_check_branch
      %34 = sbr.rel (0) target = $region13
    $region12: #{tpu_custom_call.1} parent=1 // pred_region
      _
    $region13: #{tpu_custom_call.1} parent=1 // pred_fallthru
      _
    // Predicated region
    $region14: #{tpu_custom_call.1} parent=1 // pred_check
      _
    $region15: #{tpu_custom_call.1} parent=1 // pred_check_branch
      %36 = sbr.rel (0) target = $region17
    $region16: #{tpu_custom_call.1} parent=1 // pred_region
      %37 = dma.done [#allocation3], 128
    $region17: #{tpu_custom_call.1} parent=1 // pred_fallthru
      _
    // Predicated region
    $region18: #{tpu_custom_call.1} parent=1 // pred_check
      _
    $region19: #{tpu_custom_call.1} parent=1 // pred_check_branch
      %39 = sbr.rel (0) target = $region21
    $region20: #{tpu_custom_call.1} parent=1 // pred_region
      %40 = dma.done [#allocation6], 3072
    $region21: #{tpu_custom_call.1} parent=1 // pred_fallthru
      _
    %v42 = vld [vmem:[#allocation2] sm:$0xff]
    %v43 = vpack.c.bf16 %v42, %v42
    %v44 = vld [vmem:[#allocation5] sm:$0xf]
    %v45 = vld [vmem:[#allocation5 + $0x4] sm:$0xf]
    %v46 = vld [vmem:[#allocation5 + $0x8] sm:$0xf]
    %v47 = vld [vmem:[#allocation5 + $0xc] sm:$0xf]
    %v48 = vld [vmem:[%s2] sm:$0x1]
    %v50 = vlaneseq
    %v51 = vshrl.u32 %v50, 7
    %v52 = vsub.s32 0, %v51
    %v53 = vrot.slane %v48, %v52
    %v59 = vunpack.c.l.b16 %v44
    %v60 = vunpack.c.l.b16 %v45
    %v61 = vunpack.c.l.b16 %v46
    %v62 = vunpack.c.l.b16 %v47
    %v63 = vpack.c.b16 %v60, %v59
    %v64 = vpack.c.b16 %v62, %v61
    %vm67 = vcmask 261120
    %v69 = vsel %vm67, %v43, 0
    %71 = vmatprep.subr.bf16.mxu0 0
    %72 = vmatpush1.bf16.msra.mxu0 0
    %73 = vmatprep.subr.bf16.mxu0 0
    %74 = vmatpush1.bf16.msra.mxu0 0
    %75 = vmatprep.subr.bf16.mxu0 0
    %76 = vmatpush1.bf16.msra.mxu0 0
    %77 = vmatprep.subr.bf16.mxu0 0
    %78 = vmatpush1.bf16.msra.mxu0 0
    %79 = vmatprep.subr.bf16.mxu0 0
    %80 = vmatpush1.bf16.msra.mxu0 0
    %81 = vmatprep.subr.bf16.mxu0 0
    %82 = vmatpush1.bf16.msra.mxu0 0
    %83 = vmatprep.subr.bf16.mxu0 0
    %84 = vmatpush1.bf16.msra.mxu0 %v64
    %85 = vmatprep.subr.bf16.mxu0 0
    %86 = vmatpush1.bf16.msra.mxu0 %v63
    %87 = vmatprep.subr.bf16.mxu0 0
    %88 = vmatpush2.bf16.msra.mxu0 0
    %89 = vmatprep.subr.bf16.mxu0 0
    %90 = vmatpush2.bf16.msra.mxu0 0
    %91 = vmatprep.subr.bf16.mxu0 0
    %92 = vmatpush2.bf16.msra.mxu0 0
    %93 = vmatprep.subr.bf16.mxu0 0
    %94 = vmatpush2.bf16.msra.mxu0 0
    %95 = vmatprep.subr.bf16.mxu0 0
    %96 = vmatpush2.bf16.msra.mxu0 0
    %97 = vmatprep.subr.bf16.mxu0 0
    %98 = vmatpush2.bf16.msra.mxu0 0
    %99 = vmatprep.subr.bf16.mxu0 0
    %100 = vmatpush2.bf16.msra.mxu0 0
    %101 = vmatprep.subr.bf16.mxu0 0
    %102 = vmatpush2.bf16.msra.mxu0 0
    %103 = vmatprep.mubr.bf16.mxu0 0
    %104 = vmatmul.mubr.bf16.gmra.mxu0 %v69
    %v105 = vpop.f32.mrf.mxu0
    %v106 = vadd.f32 %v53, %v105
    %v107 = vpop.f32.mrf.mxu0
    %v108 = vpop.f32.mrf.mxu0
    %v109 = vpop.f32.mrf.mxu0
    %110 = vdwg.mxu0
    %v111 = vsub.f32 0.0, %v106
    %v112 = vmul.f32 %v111, 1.442695
    %v113 = vpow.pop %v112
    %v114 = vadd.f32 %v113, 1.0
    %v115 = vrcp.pop %v114
    %v116 = vpack.c.bf16 %v115, %v115
    %s117 = scalar_lea.vmem [#allocation5], 64
    %v118 = vld [vmem:[%s117] sm:$0xf]
    %v119 = vld [vmem:[%s117 + $0x4] sm:$0xf]
    %v120 = vld [vmem:[%s117 + $0x8] sm:$0xf]
    %v121 = vld [vmem:[%s117 + $0xc] sm:$0xf]
    %v122 = vld [vmem:[%s117 + $0x10] sm:$0xf]
    %v123 = vld [vmem:[%s117 + $0x14] sm:$0xf]
    %v124 = vld [vmem:[%s117 + $0x18] sm:$0xf]
    %v125 = vld [vmem:[%s117 + $0x1c] sm:$0xf]
    %v126 = vld [vmem:[%s117 + $0x20] sm:$0xf]
    %v127 = vld [vmem:[%s117 + $0x24] sm:$0xf]
    %v128 = vld [vmem:[%s117 + $0x28] sm:$0xf]
    %v129 = vld [vmem:[%s117 + $0x2c] sm:$0xf]
    %v130 = vld [vmem:[%s117 + $0x30] sm:$0xf]
    %v131 = vld [vmem:[%s117 + $0x34] sm:$0xf]
    %v132 = vld [vmem:[%s117 + $0x38] sm:$0xf]
    %v133 = vld [vmem:[%s117 + $0x3c] sm:$0xf]
    %s134 = scalar_lea.vmem %s2, 1
    %v135 = vld [vmem:[%s134] sm:$0x1]
    %v137 = vlaneseq
    %v138 = vshrl.u32 %v137, 7
    %v139 = vsub.s32 0, %v138
    %v140 = vrot.slane %v135, %v139
    %v158 = vunpack.c.l.b16 %v118
    %v159 = vunpack.c.l.b16 %v119
    %v160 = vunpack.c.l.b16 %v120
    %v161 = vunpack.c.l.b16 %v121
    %v162 = vunpack.c.l.b16 %v122
    %v163 = vunpack.c.l.b16 %v123
    %v164 = vunpack.c.l.b16 %v124
    %v165 = vunpack.c.l.b16 %v125
    %v166 = vunpack.c.l.b16 %v126
    %v167 = vunpack.c.l.b16 %v127
    %v168 = vunpack.c.l.b16 %v128
    %v169 = vunpack.c.l.b16 %v129
    %v170 = vunpack.c.l.b16 %v130
    %v171 = vunpack.c.l.b16 %v131
    %v172 = vunpack.c.l.b16 %v132
    %v173 = vunpack.c.l.b16 %v133
    %v174 = vpack.c.b16 %v159, %v158
    %v175 = vpack.c.b16 %v161, %v160
    %v176 = vpack.c.b16 %v163, %v162
    %v177 = vpack.c.b16 %v165, %v164
    %v178 = vpack.c.b16 %v167, %v166
    %v179 = vpack.c.b16 %v169, %v168
    %v180 = vpack.c.b16 %v171, %v170
    %v181 = vpack.c.b16 %v173, %v172
    %190 = vmatprep.subr.bf16.mxu0 0
    %191 = vmatpush1.bf16.msra.mxu0 %v181
    %192 = vmatprep.subr.bf16.mxu0 0
    %193 = vmatpush1.bf16.msra.mxu0 %v180
    %194 = vmatprep.subr.bf16.mxu0 0
    %195 = vmatpush1.bf16.msra.mxu0 %v179
    %196 = vmatprep.subr.bf16.mxu0 0
    %197 = vmatpush1.bf16.msra.mxu0 %v178
    %198 = vmatprep.subr.bf16.mxu0 0
    %199 = vmatpush1.bf16.msra.mxu0 %v177
    %200 = vmatprep.subr.bf16.mxu0 0
    %201 = vmatpush1.bf16.msra.mxu0 %v176
    %202 = vmatprep.subr.bf16.mxu0 0
    %203 = vmatpush1.bf16.msra.mxu0 %v175
    %204 = vmatprep.subr.bf16.mxu0 0
    %205 = vmatpush1.bf16.msra.mxu0 %v174
    %206 = vmatprep.subr.bf16.mxu0 0
    %207 = vmatpush2.bf16.msra.mxu0 0
    %208 = vmatprep.subr.bf16.mxu0 0
    %209 = vmatpush2.bf16.msra.mxu0 0
    %210 = vmatprep.subr.bf16.mxu0 0
    %211 = vmatpush2.bf16.msra.mxu0 0
    %212 = vmatprep.subr.bf16.mxu0 0
    %213 = vmatpush2.bf16.msra.mxu0 0
    %214 = vmatprep.subr.bf16.mxu0 0
    %215 = vmatpush2.bf16.msra.mxu0 0
    %216 = vmatprep.subr.bf16.mxu0 0
    %217 = vmatpush2.bf16.msra.mxu0 0
    %218 = vmatprep.subr.bf16.mxu0 0
    %219 = vmatpush2.bf16.msra.mxu0 0
    %220 = vmatprep.subr.bf16.mxu0 0
    %221 = vmatpush2.bf16.msra.mxu0 0
    %222 = vmatprep.mubr.bf16.mxu0 0
    %223 = vmatmul.mubr.bf16.gmra.mxu0 %v116
    %v224 = vpop.f32.mrf.mxu0
    %v225 = vadd.f32 %v140, %v224
    %v226 = vpop.f32.mrf.mxu0
    %v227 = vpop.f32.mrf.mxu0
    %v228 = vpop.f32.mrf.mxu0
    %229 = vdwg.mxu0
    %v230 = vsub.f32 0.0, %v225
    %v231 = vmul.f32 %v230, 1.442695
    %v232 = vpow.pop %v231
    %v233 = vadd.f32 %v232, 1.0
    %v234 = vrcp.pop %v233
    %v235 = vpack.c.bf16 %v234, %v234
    %s236 = scalar_lea.vmem [#allocation5], 128
    %v237 = vld [vmem:[%s236] sm:$0xf]
    %v238 = vld [vmem:[%s236 + $0x4] sm:$0xf]
    %v239 = vld [vmem:[%s236 + $0x8] sm:$0xf]
    %v240 = vld [vmem:[%s236 + $0xc] sm:$0xf]
    %v241 = vld [vmem:[%s236 + $0x10] sm:$0xf]
    %v242 = vld [vmem:[%s236 + $0x14] sm:$0xf]
    %v243 = vld [vmem:[%s236 + $0x18] sm:$0xf]
    %v244 = vld [vmem:[%s236 + $0x1c] sm:$0xf]
    %v245 = vld [vmem:[%s236 + $0x20] sm:$0xf]
    %v246 = vld [vmem:[%s236 + $0x24] sm:$0xf]
    %v247 = vld [vmem:[%s236 + $0x28] sm:$0xf]
    %v248 = vld [vmem:[%s236 + $0x2c] sm:$0xf]
    %v249 = vld [vmem:[%s236 + $0x30] sm:$0xf]
    %v250 = vld [vmem:[%s236 + $0x34] sm:$0xf]
    %v251 = vld [vmem:[%s236 + $0x38] sm:$0xf]
    %v252 = vld [vmem:[%s236 + $0x3c] sm:$0xf]
    %s253 = scalar_lea.vmem %s2, 2
    %v254 = vld [vmem:[%s253] sm:$0x1]
    %v256 = vlaneseq
    %v257 = vshrl.u32 %v256, 7
    %v258 = vsub.s32 0, %v257
    %v259 = vrot.slane %v254, %v258
    %v277 = vunpack.c.l.b16 %v237
    %v278 = vunpack.c.l.b16 %v238
    %v279 = vunpack.c.l.b16 %v239
    %v280 = vunpack.c.l.b16 %v240
    %v281 = vunpack.c.l.b16 %v241
    %v282 = vunpack.c.l.b16 %v242
    %v283 = vunpack.c.l.b16 %v243
    %v284 = vunpack.c.l.b16 %v244
    %v285 = vunpack.c.l.b16 %v245
    %v286 = vunpack.c.l.b16 %v246
    %v287 = vunpack.c.l.b16 %v247
    %v288 = vunpack.c.l.b16 %v248
    %v289 = vunpack.c.l.b16 %v249
    %v290 = vunpack.c.l.b16 %v250
    %v291 = vunpack.c.l.b16 %v251
    %v292 = vunpack.c.l.b16 %v252
    %v293 = vpack.c.b16 %v278, %v277
    %v294 = vpack.c.b16 %v280, %v279
    %v295 = vpack.c.b16 %v282, %v281
    %v296 = vpack.c.b16 %v284, %v283
    %v297 = vpack.c.b16 %v286, %v285
    %v298 = vpack.c.b16 %v288, %v287
    %v299 = vpack.c.b16 %v290, %v289
    %v300 = vpack.c.b16 %v292, %v291
    %309 = vmatprep.subr.bf16.mxu0 0
    %310 = vmatpush1.bf16.msra.mxu0 %v300
    %311 = vmatprep.subr.bf16.mxu0 0
    %312 = vmatpush1.bf16.msra.mxu0 %v299
    %313 = vmatprep.subr.bf16.mxu0 0
    %314 = vmatpush1.bf16.msra.mxu0 %v298
    %315 = vmatprep.subr.bf16.mxu0 0
    %316 = vmatpush1.bf16.msra.mxu0 %v297
    %317 = vmatprep.subr.bf16.mxu0 0
    %318 = vmatpush1.bf16.msra.mxu0 %v296
    %319 = vmatprep.subr.bf16.mxu0 0
    %320 = vmatpush1.bf16.msra.mxu0 %v295
    %321 = vmatprep.subr.bf16.mxu0 0
    %322 = vmatpush1.bf16.msra.mxu0 %v294
    %323 = vmatprep.subr.bf16.mxu0 0
    %324 = vmatpush1.bf16.msra.mxu0 %v293
    %325 = vmatprep.subr.bf16.mxu0 0
    %326 = vmatpush2.bf16.msra.mxu0 0
    %327 = vmatprep.subr.bf16.mxu0 0
    %328 = vmatpush2.bf16.msra.mxu0 0
    %329 = vmatprep.subr.bf16.mxu0 0
    %330 = vmatpush2.bf16.msra.mxu0 0
    %331 = vmatprep.subr.bf16.mxu0 0
    %332 = vmatpush2.bf16.msra.mxu0 0
    %333 = vmatprep.subr.bf16.mxu0 0
    %334 = vmatpush2.bf16.msra.mxu0 0
    %335 = vmatprep.subr.bf16.mxu0 0
    %336 = vmatpush2.bf16.msra.mxu0 0
    %337 = vmatprep.subr.bf16.mxu0 0
    %338 = vmatpush2.bf16.msra.mxu0 0
    %339 = vmatprep.subr.bf16.mxu0 0
    %340 = vmatpush2.bf16.msra.mxu0 0
    %341 = vmatprep.mubr.bf16.mxu0 0
    %342 = vmatmul.mubr.bf16.gmra.mxu0 %v235
    %v343 = vpop.f32.mrf.mxu0
    %v344 = vadd.f32 %v259, %v343
    %v345 = vpop.f32.mrf.mxu0
    %v346 = vpop.f32.mrf.mxu0
    %v347 = vpop.f32.mrf.mxu0
    %348 = vdwg.mxu0
    %v349 = vpack.c.bf16 %v344, %v344
    %350 = vst [vmem:[#allocation7] sm:$0xf] %v349
    // Predicated region
    $region22: #{tpu_custom_call.1} parent=1 // pred_check
      _
    $region23: #{tpu_custom_call.1} parent=1 // pred_check_branch
      %352 = sbr.rel (0) target = $region25
    $region24: #{tpu_custom_call.1} parent=1 // pred_region
      %s354 = ssub.s32 64, 64
      %355 = vsyncadd [#allocation4], %s354
      %s357 = sshll.u32 [#allocation7], 4
      %s358 = int_to_ptr.vmem [resolvable:$true] %s357
      %360 = dma.vmem_to_hbm [thread:$0]  %s358, 64, %s3, [#allocation4]
    $region25: #{tpu_custom_call.1} parent=1 // pred_fallthru
      _
    // Predicated region
    $region26: #{tpu_custom_call.1} parent=1 // pred_check
      _
    $region27: #{tpu_custom_call.1} parent=1 // pred_check_branch
      %362 = sbr.rel (0) target = $region29
    $region28: #{tpu_custom_call.1} parent=1 // pred_region
      %363 = dma.done [#allocation4], 64
    $region29: #{tpu_custom_call.1} parent=1 // pred_fallthru
      _
    %364 = vsyncpa [#allocation3], 1
    %365 = vsyncpa [#allocation6], 1
    %366 = vsyncpa [#allocation4], 1

</llo_original>
